<compile_context>
chip_gen: v5e
topology: v5e:2x2
jax: 0.10.0
libtpu: 0.0.40
codegen_flags: <defaults>
</compile_context>

<pallas_src>
import functools

import jax
import jax.numpy as jnp
from jax import lax
from jax.experimental import pallas as pl
from jax.experimental.pallas import tpu as pltpu


def _round_up(x, m):
    return ((x + m - 1) // m) * m


def _vmem_capacity_bytes():
    try:
        info = pltpu.get_tpu_info()
        cap = getattr(info, "vmem_capacity_bytes", None)
        if cap:
            return int(cap)
    except Exception:
        pass
    return 64 << 20  # conservative default (v7x per-core VMEM)


def _seg_enc_loss_kernel(act_ref, lab_ref, out_ref, acc_ref, *,
                         batch_size, tile_b, tiles_per_slot):
    s = pl.program_id(0)            # parallel slot (v7x: one per TensorCore)
    t = pl.program_id(1)            # reduction over this slot's batch tiles

    # --- init per-slot accumulators on the slot's first tile ---
    @pl.when(t == 0)
    def _init():
        acc_ref[0] = 0.0            # sum of per-row CE terms
        acc_ref[1] = 0.0            # number of correct predictions

    logits = act_ref[...].astype(jnp.float32)            # [TB, C] f32 compute
    labels = lab_ref[...]                                 # [TB, 1] int32
    tb, c = logits.shape

    # valid-row mask for the ragged last tile (and clamped duplicate tiles);
    # uses the UN-clamped logical tile index so duplicated data is never counted.
    tile_idx = s * tiles_per_slot + t
    row_ids = tile_idx * tile_b + lax.broadcasted_iota(jnp.int32, (tb, 1), 0)
    valid = row_ids < batch_size                          # [TB, 1] bool

    # --- cross entropy terms (stable logsumexp per row) ---
    row_max = jnp.max(logits, axis=-1, keepdims=True)                      # [TB, 1]
    lse = row_max + jnp.log(jnp.sum(jnp.exp(logits - row_max),
                                    axis=-1, keepdims=True))               # [TB, 1]
    class_ids = lax.broadcasted_iota(jnp.int32, (tb, c), 1)                # [TB, C]
    label_logit = jnp.sum(jnp.where(class_ids == labels, logits, 0.0),
                          axis=-1, keepdims=True)                          # [TB, 1]
    ce_terms = jnp.where(valid, lse - label_logit, 0.0)                    # [TB, 1]

    # --- accuracy (argmax with first-index tie break, matches torch) ---
    is_max = logits == row_max
    pred = jnp.min(jnp.where(is_max, class_ids, c), axis=-1, keepdims=True)  # [TB, 1]
    correct = ((pred == labels) & valid).astype(jnp.float32)                 # [TB, 1]

    # --- accumulate ---
    acc_ref[0] += jnp.sum(ce_terms)
    acc_ref[1] += jnp.sum(correct)

    # --- emit this slot's partial sums on its last tile (lane-dense block) ---
    @pl.when(t == pl.num_programs(1) - 1)
    def _finalize():
        lane = lax.broadcasted_iota(jnp.int32, (1, 1, 128), 2)
        out_ref[...] = jnp.where(lane == 0, acc_ref[0],
                                 jnp.where(lane == 1, acc_ref[1], 0.0))


def segment_encoder_loss(model_output, batch, *, tile_b=None, n_slots=2):
    """Mirrors SegmentEncoderLoss.forward: returns (loss, loss_dict)."""
    activation = model_output["activation"]              # [B, C] float (any dtype)
    category_id = batch["action_label_id"]               # [B] int
    B, C = activation.shape
    itemsize = activation.dtype.itemsize

    # Sublane granule per dtype (f32: 8, bf16: 16, int8/fp8: 32).
    gran = max(8, 32 // max(1, itemsize))

    vmem_cap = _vmem_capacity_bytes()
    if tile_b is None:
        # VMEM budget per batch row: double-buffered native input tile plus
        # ~6 [tb, C] f32 live temporaries in the body (logits, exp, iota,
        # selects), plus the small labels tile.
        per_row_bytes = 2 * C * itemsize + 6 * C * 4 + 16
        budget = int(0.35 * vmem_cap)
        tb = budget // per_row_bytes
        tb = min(tb, (4 << 20) // max(1, C * itemsize))   # native tile <= ~4 MiB
        tb = max((tb // gran) * gran, gran)
    else:
        tb = _round_up(int(tile_b), gran)
    tb = min(tb, _round_up(B, gran))

    num_tiles = pl.cdiv(B, tb)
    slots = n_slots if num_tiles >= n_slots else 1
    tiles_per_slot = pl.cdiv(num_tiles, slots)

    labels = category_id.astype(jnp.int32).reshape(B, 1)

    # Row-block index map shared by activation & labels.  The clamp only
    # affects which (already-covered) data the trailing duplicate tile DMAs;
    # the in-kernel mask uses the un-clamped logical index, so nothing is
    # double counted and no DMA ever goes out of bounds.
    def row_map(s, t):
        return (jnp.minimum(s * tiles_per_slot + t, num_tiles - 1), 0)

    kernel = functools.partial(_seg_enc_loss_kernel, batch_size=B,
                               tile_b=tb, tiles_per_slot=tiles_per_slot)

    cost = pl.CostEstimate(
        flops=6 * B * C,
        transcendentals=B * C + B,
        bytes_accessed=B * C * itemsize + B * 4 + slots * 128 * 4,
    )

    out = pl.pallas_call(
        kernel,
        out_shape=jax.ShapeDtypeStruct((slots, 1, 128), jnp.float32),
        grid=(slots, tiles_per_slot),
        in_specs=[
            pl.BlockSpec((tb, C), row_map),               # activation tile (native dtype)
            pl.BlockSpec((tb, 1), row_map),               # labels tile
        ],
        out_specs=pl.BlockSpec((1, 1, 128), lambda s, t: (s, 0, 0)),
        scratch_shapes=[pltpu.SMEM((2,), jnp.float32)],
        compiler_params=pltpu.CompilerParams(
            dimension_semantics=("parallel", "arbitrary"),
            vmem_limit_bytes=int(0.7 * vmem_cap)),
        cost_estimate=cost,
    )(activation, labels)

    inv_b = jnp.float32(1.0 / B)
    ce = jnp.sum(out[:, 0, 0]) * inv_b
    acc = jnp.sum(out[:, 0, 1]) * inv_b
    loss = 0.0 + ce
    loss_dict = {"loss": loss, "ce": ce, "acc": acc}
    return loss, loss_dict


def _reference(activation, category_id):
    logits = activation.astype(jnp.float32)
    lse = jax.scipy.special.logsumexp(logits, axis=1)
    label_logit = jnp.take_along_axis(
        logits, category_id[:, None].astype(jnp.int32), axis=1)[:, 0]
    ce = jnp.mean(lse - label_logit)
    pred = jnp.argmax(logits, axis=1)
    acc = jnp.mean((pred == category_id).astype(jnp.float32))
    return ce, acc


def _check(act, lab, *, atol=1e-5, **kwargs):
    loss, ld = segment_encoder_loss(
        {"activation": act}, {"action_label_id": lab}, **kwargs)
    loss = jax.block_until_ready(loss)
    ld = jax.tree_util.tree_map(jax.block_until_ready, ld)
    ce_r, acc_r = _reference(act, lab)
    assert jnp.allclose(ld["ce"], ce_r, atol=atol), (ld["ce"], ce_r)
    assert jnp.allclose(ld["acc"], acc_r, atol=1e-6), (ld["acc"], acc_r)
    assert jnp.allclose(loss, ce_r, atol=atol), (loss, ce_r)
    assert jnp.allclose(ld["loss"], ce_r, atol=atol)


if __name__ == "__main__":
    key = jax.random.PRNGKey(0)
    k1, k2, k3, k4, k5, k6, k7, k8 = jax.random.split(key, 8)

    # Case 1: single tile, exact-fit batch (B=8 segments, C=32 action classes).
    B, C = 8, 32
    act1 = jax.random.normal(k1, (B, C), dtype=jnp.float32)
    lab1 = jax.random.randint(k2, (B,), 0, C, dtype=jnp.int32)
    _check(act1, lab1)

    # Case 2: multi-tile grid, ragged last tile, two parallel slots (tile forced to 8).
    B2, C2 = 20, 32
    act2 = jax.random.normal(k3, (B2, C2), dtype=jnp.float32)
    lab2 = jax.random.randint(k4, (B2,), 0, C2, dtype=jnp.int32)
    _check(act2, lab2, tile_b=8)

    # Case 3: batch not a multiple of the sublane granule, odd class count, auto tile.
    B3, C3 = 13, 48
    act3 = jax.random.normal(k5, (B3, C3), dtype=jnp.float32)
    lab3 = jax.random.randint(k6, (B3,), 0, C3, dtype=jnp.int32)
    _check(act3, lab3)

    # Case 4: bf16 activations exercise the native-dtype DMA path.
    B4, C4 = 24, 32
    act4 = jax.random.normal(k7, (B4, C4), dtype=jnp.float32).astype(jnp.bfloat16)
    lab4 = jax.random.randint(k8, (B4,), 0, C4, dtype=jnp.int32)
    _check(act4, lab4, atol=1e-4)

    print("KERNEL_OK")
</pallas_src>

<mosaic_0001>
module attributes {stable_mosaic.version = 11 : i64} {
  func.func @_seg_enc_loss_kernel(%arg0: i32, %arg1: i32, %arg2: memref<8x32xf32, #tpu.memory_space<vmem>>, %arg3: memref<8x1xi32, #tpu.memory_space<vmem>>, %arg4: memref<1x1x128xf32, #tpu.memory_space<vmem>>, %arg5: memref<2xf32, #tpu.memory_space<smem>>) attributes {dimension_semantics = [#tpu.dimension_semantics<parallel>, #tpu.dimension_semantics<arbitrary>], iteration_bounds = array<i64: 1, 1>, scalar_prefetch = 0 : i64, scratch_operands = 1 : i64, tpu.core_type = #tpu.core_type<tc>, window_params = [{transform_indices = @transform_0, window_bounds = array<i64: 8, 32>}, {transform_indices = @transform_1, window_bounds = array<i64: 8, 1>}, {transform_indices = @transform_2, window_bounds = array<i64: 1, 1, 128>}]} {
    %c0_i32 = arith.constant 0 : i32
    %0 = arith.cmpi eq, %arg1, %c0_i32 : i32
    %1 = arith.extui %0 : i1 to i32
    %c0_i32_0 = arith.constant 0 : i32
    %2 = arith.cmpi ne, %1, %c0_i32_0 : i32
    scf.if %2 {
      %cst_17 = arith.constant 0.000000e+00 : f32
      %c0_18 = arith.constant 0 : index
      %59 = memref.load %arg5[%c0_18] : memref<2xf32, #tpu.memory_space<smem>>
      memref.store %cst_17, %arg5[%c0_18] : memref<2xf32, #tpu.memory_space<smem>>
      %cst_19 = arith.constant 0.000000e+00 : f32
      %c1_20 = arith.constant 1 : index
      %60 = memref.load %arg5[%c1_20] : memref<2xf32, #tpu.memory_space<smem>>
      memref.store %cst_19, %arg5[%c1_20] : memref<2xf32, #tpu.memory_space<smem>>
    } else {
    }
    %c0 = arith.constant 0 : index
    %c0_1 = arith.constant 0 : index
    %3 = vector.load %arg2[%c0, %c0_1] : memref<8x32xf32, #tpu.memory_space<vmem>>, vector<8x32xf32>
    %c0_2 = arith.constant 0 : index
    %c0_3 = arith.constant 0 : index
    %4 = vector.load %arg3[%c0_2, %c0_3] : memref<8x1xi32, #tpu.memory_space<vmem>>, vector<8x1xi32>
    %c1_i32 = arith.constant 1 : i32
    %5 = arith.muli %arg0, %c1_i32 : i32
    %6 = arith.addi %5, %arg1 : i32
    %c8_i32 = arith.constant 8 : i32
    %7 = arith.muli %6, %c8_i32 : i32
    %8 = tpu.iota {dimensions = array<i32: 0>} : vector<8x1xi32>
    %9 = vector.broadcast %7 : i32 to vector<8x1xi32>
    %10 = arith.addi %9, %8 : vector<8x1xi32>
    %c8_i32_4 = arith.constant 8 : i32
    %11 = vector.broadcast %c8_i32_4 : i32 to vector<8x1xi32>
    %12 = arith.cmpi slt, %10, %11 : vector<8x1xi32>
    %cst = arith.constant dense<0xFF800000> : vector<8xf32>
    %13 = vector.multi_reduction <maximumf>, %3, %cst [1] : vector<8x32xf32> to vector<8xf32>
    %14 = vector.shape_cast %13 : vector<8xf32> to vector<8x1xf32>
    %15 = vector.broadcast %14 : vector<8x1xf32> to vector<8x32xf32>
    %16 = arith.subf %3, %15 : vector<8x32xf32>
    %17 = math.exp %16 : vector<8x32xf32>
    %cst_5 = arith.constant dense<0.000000e+00> : vector<8xf32>
    %18 = vector.multi_reduction <add>, %17, %cst_5 [1] : vector<8x32xf32> to vector<8xf32>
    %19 = vector.shape_cast %18 : vector<8xf32> to vector<8x1xf32>
    %20 = math.log %19 : vector<8x1xf32>
    %21 = arith.addf %14, %20 : vector<8x1xf32>
    %22 = tpu.iota {dimensions = array<i32: 1>} : vector<8x32xi32>
    %23 = vector.broadcast %4 : vector<8x1xi32> to vector<8x32xi32>
    %24 = arith.cmpi eq, %22, %23 : vector<8x32xi32>
    %cst_6 = arith.constant 0.000000e+00 : f32
    %25 = vector.broadcast %cst_6 : f32 to vector<8x32xf32>
    %26 = arith.select %24, %3, %25 : vector<8x32xi1>, vector<8x32xf32>
    %cst_7 = arith.constant dense<0.000000e+00> : vector<8xf32>
    %27 = vector.multi_reduction <add>, %26, %cst_7 [1] : vector<8x32xf32> to vector<8xf32>
    %28 = vector.shape_cast %27 : vector<8xf32> to vector<8x1xf32>
    %29 = arith.subf %21, %28 : vector<8x1xf32>
    %cst_8 = arith.constant 0.000000e+00 : f32
    %30 = vector.broadcast %cst_8 : f32 to vector<8x1xf32>
    %31 = arith.select %12, %29, %30 : vector<8x1xi1>, vector<8x1xf32>
    %32 = vector.broadcast %14 : vector<8x1xf32> to vector<8x32xf32>
    %33 = arith.cmpf oeq, %3, %32 : vector<8x32xf32>
    %c32_i32 = arith.constant 32 : i32
    %34 = vector.broadcast %c32_i32 : i32 to vector<8x32xi32>
    %35 = arith.select %33, %22, %34 : vector<8x32xi1>, vector<8x32xi32>
    %cst_9 = arith.constant dense<2147483647> : vector<8xi32>
    %36 = vector.multi_reduction <minsi>, %35, %cst_9 [1] : vector<8x32xi32> to vector<8xi32>
    %37 = vector.shape_cast %36 : vector<8xi32> to vector<8x1xi32>
    %38 = arith.cmpi eq, %37, %4 : vector<8x1xi32>
    %39 = arith.andi %38, %12 : vector<8x1xi1>
    %40 = arith.extui %39 : vector<8x1xi1> to vector<8x1xi32>
    %41 = arith.sitofp %40 : vector<8x1xi32> to vector<8x1xf32>
    %c0_10 = arith.constant 0 : index
    %42 = memref.load %arg5[%c0_10] : memref<2xf32, #tpu.memory_space<smem>>
    %43 = vector.shape_cast %31 : vector<8x1xf32> to vector<1x8x1xf32>
    %cst_11 = arith.constant dense<0.000000e+00> : vector<1xf32>
    %44 = vector.multi_reduction <add>, %43, %cst_11 [1, 2] : vector<1x8x1xf32> to vector<1xf32>
    %45 = vector.shape_cast %44 : vector<1xf32> to vector<1x1x1xf32>
    %46 = vector.extract %45[0, 0, 0] : f32 from vector<1x1x1xf32>
    %47 = arith.addf %42, %46 : f32
    %c0_12 = arith.constant 0 : index
    %48 = memref.load %arg5[%c0_12] : memref<2xf32, #tpu.memory_space<smem>>
    memref.store %47, %arg5[%c0_12] : memref<2xf32, #tpu.memory_space<smem>>
    %c1 = arith.constant 1 : index
    %49 = memref.load %arg5[%c1] : memref<2xf32, #tpu.memory_space<smem>>
    %50 = vector.shape_cast %41 : vector<8x1xf32> to vector<1x8x1xf32>
    %cst_13 = arith.constant dense<0.000000e+00> : vector<1xf32>
    %51 = vector.multi_reduction <add>, %50, %cst_13 [1, 2] : vector<1x8x1xf32> to vector<1xf32>
    %52 = vector.shape_cast %51 : vector<1xf32> to vector<1x1x1xf32>
    %53 = vector.extract %52[0, 0, 0] : f32 from vector<1x1x1xf32>
    %54 = arith.addf %49, %53 : f32
    %c1_14 = arith.constant 1 : index
    %55 = memref.load %arg5[%c1_14] : memref<2xf32, #tpu.memory_space<smem>>
    memref.store %54, %arg5[%c1_14] : memref<2xf32, #tpu.memory_space<smem>>
    %c0_i32_15 = arith.constant 0 : i32
    %56 = arith.cmpi eq, %arg1, %c0_i32_15 : i32
    %57 = arith.extui %56 : i1 to i32
    %c0_i32_16 = arith.constant 0 : i32
    %58 = arith.cmpi ne, %57, %c0_i32_16 : i32
    scf.if %58 {
      %59 = tpu.iota {dimensions = array<i32: 2>} : vector<1x1x128xi32>
      %c0_i32_17 = arith.constant 0 : i32
      %60 = vector.broadcast %c0_i32_17 : i32 to vector<1x1x128xi32>
      %61 = arith.cmpi eq, %59, %60 : vector<1x1x128xi32>
      %c0_18 = arith.constant 0 : index
      %62 = memref.load %arg5[%c0_18] : memref<2xf32, #tpu.memory_space<smem>>
      %c1_i32_19 = arith.constant 1 : i32
      %63 = vector.broadcast %c1_i32_19 : i32 to vector<1x1x128xi32>
      %64 = arith.cmpi eq, %59, %63 : vector<1x1x128xi32>
      %c1_20 = arith.constant 1 : index
      %65 = memref.load %arg5[%c1_20] : memref<2xf32, #tpu.memory_space<smem>>
      %cst_21 = arith.constant 0.000000e+00 : f32
      %66 = vector.broadcast %65 : f32 to vector<1x1x128xf32>
      %67 = vector.broadcast %cst_21 : f32 to vector<1x1x128xf32>
      %68 = arith.select %64, %66, %67 : vector<1x1x128xi1>, vector<1x1x128xf32>
      %69 = vector.broadcast %62 : f32 to vector<1x1x128xf32>
      %70 = arith.select %61, %69, %68 : vector<1x1x128xi1>, vector<1x1x128xf32>
      %c0_22 = arith.constant 0 : index
      %c0_23 = arith.constant 0 : index
      %c0_24 = arith.constant 0 : index
      %71 = vector.load %arg4[%c0_22, %c0_23, %c0_24] : memref<1x1x128xf32, #tpu.memory_space<vmem>>, vector<1x1x128xf32>
      tpu.vector_store %arg4[%c0_22, %c0_23, %c0_24], %70 {strides = array<i32>} : memref<1x1x128xf32, #tpu.memory_space<vmem>>, vector<1x1x128xf32>,
    } else {
    }
    return
  }
  func.func @transform_0(%arg0: i32, %arg1: i32) -> (i32, i32) {
    %c1_i32 = arith.constant 1 : i32
    %0 = arith.muli %arg0, %c1_i32 : i32
    %1 = arith.addi %0, %arg1 : i32
    %c0_i32 = arith.constant 0 : i32
    %2 = arith.minsi %1, %c0_i32 : i32
    %c0_i32_0 = arith.constant 0 : i32
    %c0_i32_1 = arith.constant 0 : i32
    return %2, %c0_i32_0 : i32, i32
  }
  func.func @transform_1(%arg0: i32, %arg1: i32) -> (i32, i32) {
    %c1_i32 = arith.constant 1 : i32
    %0 = arith.muli %arg0, %c1_i32 : i32
    %1 = arith.addi %0, %arg1 : i32
    %c0_i32 = arith.constant 0 : i32
    %2 = arith.minsi %1, %c0_i32 : i32
    %c0_i32_0 = arith.constant 0 : i32
    %c0_i32_1 = arith.constant 0 : i32
    return %2, %c0_i32_0 : i32, i32
  }
  func.func @transform_2(%arg0: i32, %arg1: i32) -> (i32, i32, i32) {
    %c0_i32 = arith.constant 0 : i32
    %c0_i32_0 = arith.constant 0 : i32
    %c0_i32_1 = arith.constant 0 : i32
    return %arg0, %c0_i32, %c0_i32_0 : i32, i32, i32
  }
}

</mosaic_0001>

<llo_original>
// kernel: tpu_custom_call.1
$region0: #{tpu_custom_call.1}
  #allocation0 [shape = 'u32[]', space=smem, size = 0x4, offset = 0x4, fixed_abs, tag = 'smem constant byte address 0x4 - core index']
  #allocation1 [shape = 'u32[72,128]{1,0:T(1,128)}', space=vmem, size = 0x9000, scoped, tag = 'internal scratch']
  #allocation2 [shape = 'f32[2]{0:T(128)}', space=smem, size = 0x200, scoped, tag = 'scratch operand']
  %s0 = inlined_call_operand.vmem [shape: f32[8,32], index: 0, kind: input, shape index: {}]
  %s1 = inlined_call_operand.vmem [shape: s32[8,1], index: 1, kind: input, shape index: {}]
  %s2 = inlined_call_operand.hbm [shape: f32[1,1,128], index: 2, kind: output, shape index: {}]
  %s3 = sld [smem:[#allocation0]]
  $region26: #{tpu_custom_call.1} parent=0
    _
  %s5 = ssub.s32 1, %s3
  %s6 = scalar_select 0, %s5, %s3
  $region1: #{tpu_custom_call.1} parent=0
    #allocation3 [shape = 'u8[512]{0}', space=vmem, size = 0x400, scoped, tag = 'output window, operand 0, single buffered']
    #allocation4 [shape = 's32[1]{0}', space=sflag, size = 0x4, scoped, tag = 'scoped memory for tpu_custom_call.1']
    %7 = vsyncpa [#allocation4], 0
    // Predicated region
    $region2: #{tpu_custom_call.1} parent=1 // pred_check
      _
    $region3: #{tpu_custom_call.1} parent=1 // pred_check_branch
      %9 = sbr.rel (0) target = $region5
    $region4: #{tpu_custom_call.1} parent=1 // pred_region
      %s10 = sadd.s32 0, 0
      %p11 = scmp.lt.s32.totalorder %s10, 0
      %s12 = scalar_select %p11, %s10, 0
      %p13 = scmp.lt.s32.totalorder %s12, 0
      %s14 = scalar_select %p13, %s12, 0
      %s15 = smul.addr %s14, 8
      %s16 = scalar_lea.vmem %s0, %s15
      %s17 = sadd.s32 0, 0
      %p18 = scmp.lt.s32.totalorder %s17, 0
      %s19 = scalar_select %p18, %s17, 0
    $region5: #{tpu_custom_call.1} parent=1 // pred_fallthru
      _
    // Predicated region
    $region6: #{tpu_custom_call.1} parent=1 // pred_check
      _
    $region7: #{tpu_custom_call.1} parent=1 // pred_check_branch
      %21 = sbr.rel (0) target = $region9
    $region8: #{tpu_custom_call.1} parent=1 // pred_region
      %s22 = sadd.s32 0, 0
      %p23 = scmp.lt.s32.totalorder %s22, 0
      %s24 = scalar_select %p23, %s22, 0
      %p25 = scmp.lt.s32.totalorder %s24, 0
      %s26 = scalar_select %p25, %s24, 0
      %s27 = smul.addr %s26, 8
      %s28 = scalar_lea.vmem %s1, %s27
      %s29 = sadd.s32 0, 0
      %p30 = scmp.lt.s32.totalorder %s29, 0
      %s31 = scalar_select %p30, %s29, 0
    $region9: #{tpu_custom_call.1} parent=1 // pred_fallthru
      _
    %s32 = sadd.s32 0, 0
    %p33 = scmp.lt.s32.totalorder %s32, 0
    %s34 = scalar_select %p33, %s32, 0
    %p35 = scmp.lt.s32.totalorder %s34, 0
    %s36 = scalar_select %p35, %s34, 0
    %s37 = smul.addr %s36, 8
    %s38 = scalar_lea.vmem %s0, %s37
    %s39 = sadd.s32 0, 0
    %p40 = scmp.lt.s32.totalorder %s39, 0
    %s41 = scalar_select %p40, %s39, 0
    %p42 = scmp.lt.s32.totalorder %s41, 0
    %s43 = scalar_select %p42, %s41, 0
    %s44 = smul.addr %s43, 8
    %s45 = scalar_lea.vmem %s1, %s44
    %s46 = sadd.s32 0, 0
    %p47 = scmp.lt.s32.totalorder %s46, 0
    %s48 = scalar_select %p47, %s46, 0
    %p49 = scmp.lt.s32.totalorder %s48, 0
    %s50 = scalar_select %p49, %s48, 0
    %s51 = smul.addr %s50, 8
    %s52 = scalar_lea.vmem %s0, %s51
    %s53 = sadd.s32 0, 0
    %p54 = scmp.lt.s32.totalorder %s53, 0
    %s55 = scalar_select %p54, %s53, 0
    %s56 = sadd.s32 0, 0
    %p57 = scmp.lt.s32.totalorder %s56, 0
    %s58 = scalar_select %p57, %s56, 0
    %p59 = scmp.lt.s32.totalorder %s58, 0
    %s60 = scalar_select %p59, %s58, 0
    %s61 = smul.addr %s60, 8
    %s62 = scalar_lea.vmem %s1, %s61
    %s63 = sadd.s32 0, 0
    %p64 = scmp.lt.s32.totalorder %s63, 0
    %s65 = scalar_select %p64, %s63, 0
    %p66 = scmp.eq.s32.totalorder 0, 0
    // Predicated region
    $region10: #{tpu_custom_call.1} parent=1 // pred_check
      %p67 = pneg %p66
    $region11: #{tpu_custom_call.1} parent=1 // pred_check_branch
      %69 = sbr.rel (%p67) target = $region13
    $region12: #{tpu_custom_call.1} parent=1 // pred_region
      %s70 = scalar_lea.smem [#allocation2], 0
      %71 = sst [smem:[%s70]] 0.0
      %s72 = scalar_lea.smem [#allocation2], 1
      %73 = sst [smem:[%s72]] 0.0
    $region13: #{tpu_custom_call.1} parent=1 // pred_fallthru
      _
    %v74 = vld [vmem:[%s52] sm:$0xff]
    %v75 = vld [vmem:[%s62] sm:$0xff]
    %s76 = sadd.s32 0, 0
    %s77 = smul.u32 %s76, 8
    %v78 = vlaneseq
    %v79 = vshrl.u32 %v78, 7
    %v80 = vstv %s77
    %v81 = vadd.s32 %v80, %v79
    %vm82 = vcmp.lt.s32.totalorder %v81, 8
    %vm83 = vcmask 261120
    %v84 = vsel %vm83, %v74, -inf
    %85 = vmax.xlane.f32.xlu0 %v84
    %v86 = vpop.xlane.xlu0 %85
    %v87 = vsub.f32 %v74, %v86
    %v88 = vmul.f32 %v87, 1.442695
    %v89 = vpow.pop %v88
    %v90 = vsel %vm83, %v89, 0.0
    %91 = vadd.xlane.f32.xlu0 %v90
    %v92 = vpop.xlane.xlu0 %91
    %v93 = vlog2.pop %v92
    %v94 = vmul.f32 %v93, 0.6931472
    %v95 = vadd.f32 %v86, %v94
    %v96 = vlaneseq
    %v97 = vand.u32 %v96, 127
    %98 = vset.pattern.permute.xlu0 0
    %99 = vperm.xlu0 %98, %v75
    %v100 = vpop.permute.xlu0 %99
    %vm101 = vcmp.eq.s32.totalorder %v97, %v100
    %v102 = vsel %vm101, %v74, 0.0
    %v103 = vsel %vm83, %v102, 0.0
    %104 = vadd.xlane.f32.xlu0 %v103
    %v105 = vpop.xlane.xlu0 %104
    %v106 = vsub.f32 %v95, %v105
    %v107 = vsel %vm82, %v106, 0.0
    %vm108 = vcmp.eq.f32.partialorder %v74, %v86
    %v109 = vsel %vm108, %v97, 32
    %v110 = vsel %vm83, %v109, 2147483647
    %v111 = vand.u32 %v110, 65535
    %v112 = vshra.s32 %v110, 16
    %v113 = vcvt.s32.f32 %v111
    %v114 = vcvt.s32.f32 %v112
    %115 = vmin.xlane.f32.xlu0 %v114
    %v116 = vpop.xlane.xlu0 %115
    %vm117 = vcmp.eq.f32.partialorder %v114, %v116
    %v118 = vsel %vm117, %v113, inf
    %119 = vmin.xlane.f32.xlu0 %v118
    %v120 = vpop.xlane.xlu0 %119
    %v121 = vcvt.f32.s32 %v120
    %v122 = vcvt.f32.s32 %v116
    %v123 = vshll.u32 %v122, 16
    %v124 = vadd.s32 %v123, %v121
    %vm125 = vcmp.eq.s32.totalorder %v124, %v75
    %vm126 = vmand %vm125, %vm82
    %v127 = vsel %vm126, 1, 0
    %v128 = vcvt.s32.f32 %v127
    %s129 = sld [smem:[#allocation2]]
    %vm130 = vcmask 7168
    %v131 = vsel %vm130, %v107, 0.0
    %132 = vadd.xlane.f32.xlu0 %v131
    %v133 = vpop.xlane.xlu0 %132
    %v134 = vrot.slane %v133, 4
    %v135 = vadd.f32 %v133, %v134
    %v136 = vrot.slane %v135, 2
    %v137 = vadd.f32 %v135, %v136
    %v138 = vrot.slane %v137, 1
    %v139 = vadd.f32 %v137, %v138
    %s140 = vtos %v139
    %s141 = sadd.f32 %s129, %s140
    %s142 = scalar_lea.smem [#allocation2], 0
    %143 = sst [smem:[%s142]] %s141
    %s144 = sld [smem:[#allocation2 + $0x1]]
    %v145 = vsel %vm130, %v128, 0.0
    %146 = vadd.xlane.f32.xlu0 %v145
    %v147 = vpop.xlane.xlu0 %146
    %v148 = vrot.slane %v147, 4
    %v149 = vadd.f32 %v147, %v148
    %v150 = vrot.slane %v149, 2
    %v151 = vadd.f32 %v149, %v150
    %v152 = vrot.slane %v151, 1
    %v153 = vadd.f32 %v151, %v152
    %s154 = vtos %v153
    %s155 = sadd.f32 %s144, %s154
    %s156 = scalar_lea.smem [#allocation2], 1
    %157 = sst [smem:[%s156]] %s155
    // Predicated region
    $region14: #{tpu_custom_call.1} parent=1 // pred_check
      %p158 = pneg %p66
    $region15: #{tpu_custom_call.1} parent=1 // pred_check_branch
      %160 = sbr.rel (%p158) target = $region17
    $region16: #{tpu_custom_call.1} parent=1 // pred_region
      %vm161 = vcmp.eq.s32.totalorder %v97, 0
      %s162 = sld [smem:[#allocation2]]
      %vm163 = vcmp.eq.s32.totalorder %v97, 1
      %s164 = sld [smem:[#allocation2 + $0x1]]
      %v165 = vstv %s164
      %v166 = vsel %vm163, %v165, 0.0
      %v167 = vstv %s162
      %v168 = vsel %vm161, %v167, %v166
      %169 = vst [vmem:[#allocation3] sm:$0x1] %v168
    $region17: #{tpu_custom_call.1} parent=1 // pred_fallthru
      _
    // Predicated region
    $region18: #{tpu_custom_call.1} parent=1 // pred_check
      _
    $region19: #{tpu_custom_call.1} parent=1 // pred_check_branch
      %171 = sbr.rel (0) target = $region21
    $region20: #{tpu_custom_call.1} parent=1 // pred_region
      %173 = vsyncadd [#allocation4], 0
      %s175 = sshll.u32 [#allocation3], 4
      %s176 = int_to_ptr.vmem [resolvable:$true] %s175
      %s177 = sshll.u32 %s2, 4
      %s178 = int_to_ptr.hbm [resolvable:$true] %s177
      %180 = dma.vmem_to_hbm [thread:$0]  %s176, 16, %s178, [#allocation4]
    $region21: #{tpu_custom_call.1} parent=1 // pred_fallthru
      _
    // Predicated region
    $region22: #{tpu_custom_call.1} parent=1 // pred_check
      _
    $region23: #{tpu_custom_call.1} parent=1 // pred_check_branch
      %182 = sbr.rel (0) target = $region25
    $region24: #{tpu_custom_call.1} parent=1 // pred_region
      %184 = dma.done [#allocation4], 16
    $region25: #{tpu_custom_call.1} parent=1 // pred_fallthru
      _
    %185 = vsyncpa [#allocation4], 1

</llo_original>
